<compile_context>
chip_gen: v5e
topology: v5e:2x2
jax: 0.10.0
libtpu: 0.0.40
codegen_flags: <defaults>
</compile_context>

<pallas_src>
import functools

import jax
import jax.numpy as jnp
from jax.experimental import pallas as pl
from jax.experimental.pallas import tpu as pltpu

_LANES = 128


def _chip_config():
    """Generation-dependent tile size / core split / VMEM limit."""
    try:
        kind = jax.devices()[0].device_kind.lower()
    except Exception:  # pragma: no cover
        kind = ""
    if "v7" in kind or "tpu7" in kind:
        # 2 TensorCores/chip, 64 MiB physical VMEM, 3.2 TB/s HBM.
        return dict(num_cores=2, max_tile_rows=4096, vmem_limit=48 * 1024 * 1024)
    if "v6" in kind:
        return dict(num_cores=1, max_tile_rows=4096, vmem_limit=64 * 1024 * 1024)
    if "v5" in kind:
        return dict(num_cores=1, max_tile_rows=2048, vmem_limit=32 * 1024 * 1024)
    # Unknown generation: conservative single-core defaults.
    return dict(num_cores=1, max_tile_rows=2048, vmem_limit=None)


def _bce_sum_kernel(pred_ref, tgt_ref, out_ref, *, tile_rows, steps_per_core,
                    rows_total, mask_from_block, two_axis):
    if two_axis:
        c = pl.program_id(0)                 # core axis (v7x megacore split)
        j = pl.program_id(1)                 # sequential reduction axis
        blk = c * steps_per_core + j         # unclamped linear block id
    else:
        j = pl.program_id(0)
        blk = j

    @pl.when(j == 0)
    def _():
        out_ref[...] = jnp.zeros_like(out_ref)

    p = pred_ref[...].astype(jnp.float32)
    t = tgt_ref[...].astype(jnp.float32)

    # PyTorch BCELoss clamps the log terms at -100.  Accumulate the *positive*
    # blend  t*log_p + (1-t)*log_1mp == log_1mp + t*(log_p - log_1mp);
    # the final negate + divide-by-N happen once in the wrapper.
    log_p = jnp.maximum(jnp.log(p), -100.0)
    log_1mp = jnp.maximum(jnp.log(1.0 - p), -100.0)
    val = log_1mp + t * (log_p - log_1mp)

    def _accumulate(x):
        if tile_rows % 8 == 0:
            # VPU-only partial reduce into the resident (8, 128) accumulator.
            out_ref[...] += x.reshape(tile_rows // 8, 8, _LANES).sum(axis=0)
        else:
            # Tiny single-tile inputs: plain sublane reduce into row 0.
            out_ref[0:1, :] += jnp.sum(x, axis=0, keepdims=True)

    # Interior blocks: every row is valid and the lane pad is ones (exactly 0
    # contribution), so no masking work at all.
    @pl.when(blk < mask_from_block)
    def _():
        _accumulate(val)

    # Ragged tail block / duplicated clamped blocks on the core split: zero
    # out rows whose global row index is past the padded 2-D row count.
    @pl.when(blk >= mask_from_block)
    def _():
        row = (jax.lax.broadcasted_iota(jnp.int32, (tile_rows, _LANES), 0)
               + blk * tile_rows)
        _accumulate(jnp.where(row < rows_total, val, 0.0))


def bce_loss(pred, target):
    """Mean BCE loss; matches torch.nn.BCELoss()(pred.view(-1), target)."""
    pred_flat = jnp.reshape(pred, (-1,))
    tgt_flat = jnp.reshape(target, (-1,))
    n = pred_flat.shape[0]
    assert tgt_flat.shape[0] == n, "pred.view(-1) and target must match in length"

    cfg = _chip_config()

    # Pad the flat vector to a multiple of 128 lanes with ones (< 128 elements,
    # a no-op when n % 128 == 0).  Ones contribute exactly 0 to the positive
    # sum, so the lane pad needs no masking.
    lane_pad = (-n) % _LANES
    if lane_pad:
        pred_flat = jnp.concatenate(
            [pred_flat, jnp.ones((lane_pad,), pred_flat.dtype)])
        tgt_flat = jnp.concatenate(
            [tgt_flat, jnp.ones((lane_pad,), tgt_flat.dtype)])
    rows = (n + lane_pad) // _LANES

    pred2d = pred_flat.reshape(rows, _LANES)
    tgt2d = tgt_flat.reshape(rows, _LANES)

    tile_rows = min(cfg["max_tile_rows"], rows)
    total_blocks = -(-rows // tile_rows)
    num_cores = cfg["num_cores"] if total_blocks > 1 else 1
    ragged_last = (rows % tile_rows) != 0
    mask_from_block = total_blocks - 1 if ragged_last else total_blocks

    compiler_kwargs = {}
    if cfg["vmem_limit"] is not None:
        compiler_kwargs["vmem_limit_bytes"] = cfg["vmem_limit"]

    if num_cores > 1:
        steps_per_core = -(-total_blocks // num_cores)

        def in_map(c, j):
            # Clamp so any extra step on the last core re-reads a valid block;
            # its contribution is zeroed by the in-kernel row mask.
            return (jnp.minimum(c * steps_per_core + j, total_blocks - 1), 0)

        kernel = functools.partial(
            _bce_sum_kernel, tile_rows=tile_rows, steps_per_core=steps_per_core,
            rows_total=rows, mask_from_block=mask_from_block, two_axis=True)

        grid = (num_cores, steps_per_core)
        in_specs = [pl.BlockSpec((tile_rows, _LANES), in_map),
                    pl.BlockSpec((tile_rows, _LANES), in_map)]
        out_specs = pl.BlockSpec((8, _LANES), lambda c, j: (c, 0))
        out_shape = jax.ShapeDtypeStruct((num_cores * 8, _LANES), jnp.float32)
        # Prefer sharding the core axis across both TensorCores on v7x; fall
        # back to plain "parallel" if CORE_PARALLEL is rejected by lowering.
        core_par = getattr(pltpu, "CORE_PARALLEL", "parallel")
        arb = getattr(pltpu, "ARBITRARY", "arbitrary")
        semantics_candidates = [(core_par, arb), ("parallel", "arbitrary")]
    else:
        def in_map(j):
            return (j, 0)

        kernel = functools.partial(
            _bce_sum_kernel, tile_rows=tile_rows, steps_per_core=total_blocks,
            rows_total=rows, mask_from_block=mask_from_block, two_axis=False)

        grid = (total_blocks,)
        in_specs = [pl.BlockSpec((tile_rows, _LANES), in_map),
                    pl.BlockSpec((tile_rows, _LANES), in_map)]
        out_specs = pl.BlockSpec((8, _LANES), lambda j: (0, 0))
        out_shape = jax.ShapeDtypeStruct((8, _LANES), jnp.float32)
        semantics_candidates = [("arbitrary",)]

    partial_sums = None
    last_err = None
    for sem in semantics_candidates:
        try:
            partial_sums = pl.pallas_call(
                kernel,
                out_shape=out_shape,
                grid_spec=pltpu.PrefetchScalarGridSpec(
                    num_scalar_prefetch=0,
                    grid=grid,
                    in_specs=in_specs,
                    out_specs=out_specs),
                compiler_params=pltpu.CompilerParams(
                    dimension_semantics=sem, **compiler_kwargs),
            )(pred2d, tgt2d)
            partial_sums = jax.block_until_ready(partial_sums)
            break
        except Exception as e:  # pragma: no cover - lowering fallback path
            last_err = e
            partial_sums = None
    if partial_sums is None:
        raise last_err

    # Final cross-lane/sublane reduce, negate and mean normalization (once).
    return -jnp.sum(partial_sums) / jnp.float32(n)


def _ref_bce(pred, target):
    p = jnp.reshape(pred, (-1,)).astype(jnp.float32)
    t = jnp.reshape(target, (-1,)).astype(jnp.float32)
    log_p = jnp.maximum(jnp.log(p), -100.0)
    log_1mp = jnp.maximum(jnp.log(1.0 - p), -100.0)
    return jnp.mean(-(t * log_p + (1.0 - t) * log_1mp))


if __name__ == "__main__":
    key = jax.random.PRNGKey(0)
    k1, k2, k3, k4 = jax.random.split(key, 4)

    # Case 1: NCF-style small batch (pred from a sigmoid head, shape (B, 1));
    # B not a multiple of 128 -> exercises the lane pad + single-tile path.
    batch = 1500
    pred1 = jax.nn.sigmoid(jax.random.normal(k1, (batch, 1), dtype=jnp.float32))
    tgt1 = (jax.random.uniform(k2, (batch,)) > 0.5).astype(jnp.float32)
    loss1 = bce_loss(pred1, tgt1)
    jax.block_until_ready(loss1)
    ref1 = _ref_bce(pred1, tgt1)
    assert jnp.allclose(loss1, ref1, rtol=1e-5, atol=1e-5), (loss1, ref1)

    # Case 2: larger batch -> multi-block grid, ragged (masked) tail block and,
    # on v7x, the 2-core split; still only a few MB of data.
    n2 = 5000 * 128 + 77
    pred2 = jax.nn.sigmoid(jax.random.normal(k3, (n2, 1), dtype=jnp.float32))
    tgt2 = (jax.random.uniform(k4, (n2,)) > 0.5).astype(jnp.float32)
    loss2 = bce_loss(pred2, tgt2)
    jax.block_until_ready(loss2)
    ref2 = _ref_bce(pred2, tgt2)
    assert jnp.allclose(loss2, ref2, rtol=1e-5, atol=1e-5), (loss2, ref2)

    print("KERNEL_OK")
</pallas_src>

<mosaic_0001>
module attributes {stable_mosaic.version = 11 : i64} {
  func.func @_bce_sum_kernel(%arg0: i32, %arg1: memref<12x128xf32, #tpu.memory_space<vmem>>, %arg2: memref<12x128xf32, #tpu.memory_space<vmem>>, %arg3: memref<8x128xf32, #tpu.memory_space<vmem>>) attributes {dimension_semantics = [#tpu.dimension_semantics<arbitrary>], iteration_bounds = array<i64: 1>, scalar_prefetch = 0 : i64, scratch_operands = 0 : i64, tpu.core_type = #tpu.core_type<tc>, window_params = [{transform_indices = @transform_0, window_bounds = array<i64: 12, 128>}, {transform_indices = @transform_1, window_bounds = array<i64: 12, 128>}, {pipeline_mode = #tpu.pipeline_mode<synchronous>, transform_indices = @transform_2, window_bounds = array<i64: 8, 128>}]} {
    %c0_i32 = arith.constant 0 : i32
    %0 = arith.cmpi eq, %arg0, %c0_i32 : i32
    %1 = arith.extui %0 : i1 to i32
    %c0_i32_0 = arith.constant 0 : i32
    %2 = arith.cmpi ne, %1, %c0_i32_0 : i32
    scf.if %2 {
      %cst_9 = arith.constant 0.000000e+00 : f32
      %22 = vector.broadcast %cst_9 : f32 to vector<8x128xf32>
      %c0_10 = arith.constant 0 : index
      %c0_11 = arith.constant 0 : index
      %23 = vector.load %arg3[%c0_10, %c0_11] : memref<8x128xf32, #tpu.memory_space<vmem>>, vector<8x128xf32>
      tpu.vector_store %arg3[%c0_10, %c0_11], %22 {strides = array<i32>} : memref<8x128xf32, #tpu.memory_space<vmem>>, vector<8x128xf32>,
    } else {
    }
    %c0 = arith.constant 0 : index
    %c0_1 = arith.constant 0 : index
    %3 = vector.load %arg1[%c0, %c0_1] : memref<12x128xf32, #tpu.memory_space<vmem>>, vector<12x128xf32>
    %c0_2 = arith.constant 0 : index
    %c0_3 = arith.constant 0 : index
    %4 = vector.load %arg2[%c0_2, %c0_3] : memref<12x128xf32, #tpu.memory_space<vmem>>, vector<12x128xf32>
    %5 = math.log %3 : vector<12x128xf32>
    %cst = arith.constant -1.000000e+02 : f32
    %6 = vector.broadcast %cst : f32 to vector<12x128xf32>
    %7 = arith.maximumf %5, %6 : vector<12x128xf32>
    %cst_4 = arith.constant 1.000000e+00 : f32
    %8 = vector.broadcast %cst_4 : f32 to vector<12x128xf32>
    %9 = arith.subf %8, %3 : vector<12x128xf32>
    %10 = math.log %9 : vector<12x128xf32>
    %cst_5 = arith.constant -1.000000e+02 : f32
    %11 = vector.broadcast %cst_5 : f32 to vector<12x128xf32>
    %12 = arith.maximumf %10, %11 : vector<12x128xf32>
    %13 = arith.subf %7, %12 : vector<12x128xf32>
    %14 = arith.mulf %4, %13 : vector<12x128xf32>
    %15 = arith.addf %12, %14 : vector<12x128xf32>
    %c1_i32 = arith.constant 1 : i32
    %16 = arith.cmpi slt, %arg0, %c1_i32 : i32
    %17 = arith.extui %16 : i1 to i32
    %c0_i32_6 = arith.constant 0 : i32
    %18 = arith.cmpi ne, %17, %c0_i32_6 : i32
    scf.if %18 {
      %c0_9 = arith.constant 0 : index
      %c0_10 = arith.constant 0 : index
      %22 = vector.load %arg3[%c0_9, %c0_10] : memref<8x128xf32, #tpu.memory_space<vmem>>, vector<1x128xf32>
      %cst_11 = arith.constant dense<0.000000e+00> : vector<128xf32>
      %23 = vector.multi_reduction <add>, %15, %cst_11 [0] : vector<12x128xf32> to vector<128xf32>
      %24 = vector.shape_cast %23 : vector<128xf32> to vector<1x128xf32>
      %25 = arith.addf %22, %24 : vector<1x128xf32>
      %c0_12 = arith.constant 0 : index
      %c0_13 = arith.constant 0 : index
      %26 = vector.load %arg3[%c0_12, %c0_13] : memref<8x128xf32, #tpu.memory_space<vmem>>, vector<1x128xf32>
      tpu.vector_store %arg3[%c0_12, %c0_13], %25 {strides = array<i32>} : memref<8x128xf32, #tpu.memory_space<vmem>>, vector<1x128xf32>,
    } else {
    }
    %c1_i32_7 = arith.constant 1 : i32
    %19 = arith.cmpi sge, %arg0, %c1_i32_7 : i32
    %20 = arith.extui %19 : i1 to i32
    %c0_i32_8 = arith.constant 0 : i32
    %21 = arith.cmpi ne, %20, %c0_i32_8 : i32
    scf.if %21 {
      %22 = tpu.iota {dimensions = array<i32: 0>} : vector<12x128xi32>
      %c12_i32 = arith.constant 12 : i32
      %23 = arith.muli %arg0, %c12_i32 : i32
      %24 = vector.broadcast %23 : i32 to vector<12x128xi32>
      %25 = arith.addi %22, %24 : vector<12x128xi32>
      %c12_i32_9 = arith.constant 12 : i32
      %26 = vector.broadcast %c12_i32_9 : i32 to vector<12x128xi32>
      %27 = arith.cmpi slt, %25, %26 : vector<12x128xi32>
      %cst_10 = arith.constant 0.000000e+00 : f32
      %28 = vector.broadcast %cst_10 : f32 to vector<12x128xf32>
      %29 = arith.select %27, %15, %28 : vector<12x128xi1>, vector<12x128xf32>
      %c0_11 = arith.constant 0 : index
      %c0_12 = arith.constant 0 : index
      %30 = vector.load %arg3[%c0_11, %c0_12] : memref<8x128xf32, #tpu.memory_space<vmem>>, vector<1x128xf32>
      %cst_13 = arith.constant dense<0.000000e+00> : vector<128xf32>
      %31 = vector.multi_reduction <add>, %29, %cst_13 [0] : vector<12x128xf32> to vector<128xf32>
      %32 = vector.shape_cast %31 : vector<128xf32> to vector<1x128xf32>
      %33 = arith.addf %30, %32 : vector<1x128xf32>
      %c0_14 = arith.constant 0 : index
      %c0_15 = arith.constant 0 : index
      %34 = vector.load %arg3[%c0_14, %c0_15] : memref<8x128xf32, #tpu.memory_space<vmem>>, vector<1x128xf32>
      tpu.vector_store %arg3[%c0_14, %c0_15], %33 {strides = array<i32>} : memref<8x128xf32, #tpu.memory_space<vmem>>, vector<1x128xf32>,
    } else {
    }
    return
  }
  func.func @transform_0(%arg0: i32) -> (i32, i32) {
    %c0_i32 = arith.constant 0 : i32
    %c0_i32_0 = arith.constant 0 : i32
    return %arg0, %c0_i32 : i32, i32
  }
  func.func @transform_1(%arg0: i32) -> (i32, i32) {
    %c0_i32 = arith.constant 0 : i32
    %c0_i32_0 = arith.constant 0 : i32
    return %arg0, %c0_i32 : i32, i32
  }
  func.func @transform_2(%arg0: i32) -> (i32, i32) {
    %c0_i32 = arith.constant 0 : i32
    %c0_i32_0 = arith.constant 0 : i32
    %c0_i32_1 = arith.constant 0 : i32
    return %c0_i32, %c0_i32_0 : i32, i32
  }
}

</mosaic_0001>

<llo_original>
// kernel: tpu_custom_call.1
$region0: #{tpu_custom_call.1}
  #allocation0 [shape = 'u32[]', space=smem, size = 0x4, offset = 0x4, fixed_abs, tag = 'smem constant byte address 0x4 - core index']
  #allocation1 [shape = 'u32[72,128]{1,0:T(1,128)}', space=vmem, size = 0x9000, scoped, tag = 'internal scratch']
  %s0 = inlined_call_operand.hbm [shape: f32[12,128], index: 0, kind: input, shape index: {}]
  %s1 = inlined_call_operand.hbm [shape: f32[12,128], index: 1, kind: input, shape index: {}]
  %s2 = inlined_call_operand.hbm [shape: f32[8,128], index: 2, kind: output, shape index: {}]
  %s3 = sld [smem:[#allocation0]]
  $region38: #{tpu_custom_call.1} parent=0
    _
  %s5 = ssub.s32 1, %s3
  %s6 = scalar_select 0, %s5, %s3
  $region1: #{tpu_custom_call.1} parent=0
    #allocation2 [shape = 'u8[8192]{0}', space=vmem, size = 0x2000, scoped, tag = 'input window, operand 0, single buffered']
    #allocation3 [shape = 's32[1]{0}', space=sflag, size = 0x4, scoped, tag = 'scoped memory for tpu_custom_call.1']
    #allocation4 [shape = 's32[1]{0}', space=sflag, size = 0x4, scoped, tag = 'scoped memory for tpu_custom_call.1']
    #allocation5 [shape = 'u8[8192]{0}', space=vmem, size = 0x2000, scoped, tag = 'input window, operand 1, single buffered']
    #allocation6 [shape = 's32[1]{0}', space=sflag, size = 0x4, scoped, tag = 'scoped memory for tpu_custom_call.1']
    #allocation7 [shape = 'u8[4096]{0}', space=vmem, size = 0x1000, scoped, tag = 'output window, operand 0, single buffered']
    %7 = vsyncpa [#allocation3], 0
    %8 = vsyncpa [#allocation6], 0
    %9 = vsyncpa [#allocation4], 0
    // Predicated region
    $region2: #{tpu_custom_call.1} parent=1 // pred_check
      _
    $region3: #{tpu_custom_call.1} parent=1 // pred_check_branch
      %11 = sbr.rel (0) target = $region5
    $region4: #{tpu_custom_call.1} parent=1 // pred_region
      %13 = vsyncadd [#allocation3], 0
      %s14 = sshll.u32 %s0, 4
      %s15 = int_to_ptr.hbm [resolvable:$true] %s14
      %s16 = sshll.u32 [#allocation2], 4
      %s17 = int_to_ptr.vmem [resolvable:$true] %s16
      %22 = dma.hbm_to_vmem [thread:$0]  %s15, 256, %s17, [#allocation3], 128, 128, 8
    $region5: #{tpu_custom_call.1} parent=1 // pred_fallthru
      _
    // Predicated region
    $region6: #{tpu_custom_call.1} parent=1 // pred_check
      _
    $region7: #{tpu_custom_call.1} parent=1 // pred_check_branch
      %24 = sbr.rel (0) target = $region9
    $region8: #{tpu_custom_call.1} parent=1 // pred_region
      %26 = vsyncadd [#allocation6], 0
      %s27 = sshll.u32 %s1, 4
      %s28 = int_to_ptr.hbm [resolvable:$true] %s27
      %s29 = sshll.u32 [#allocation5], 4
      %s30 = int_to_ptr.vmem [resolvable:$true] %s29
      %35 = dma.hbm_to_vmem [thread:$0]  %s28, 256, %s30, [#allocation6], 128, 128, 8
    $region9: #{tpu_custom_call.1} parent=1 // pred_fallthru
      _
    // Predicated region
    $region10: #{tpu_custom_call.1} parent=1 // pred_check
      _
    $region11: #{tpu_custom_call.1} parent=1 // pred_check_branch
      %37 = sbr.rel (0) target = $region13
    $region12: #{tpu_custom_call.1} parent=1 // pred_region
      %39 = dma.done [#allocation3], 256
    $region13: #{tpu_custom_call.1} parent=1 // pred_fallthru
      _
    // Predicated region
    $region14: #{tpu_custom_call.1} parent=1 // pred_check
      _
    $region15: #{tpu_custom_call.1} parent=1 // pred_check_branch
      %41 = sbr.rel (0) target = $region17
    $region16: #{tpu_custom_call.1} parent=1 // pred_region
      %43 = dma.done [#allocation6], 256
    $region17: #{tpu_custom_call.1} parent=1 // pred_fallthru
      _
    %p44 = scmp.eq.s32.totalorder 0, 0
    // Predicated region
    $region18: #{tpu_custom_call.1} parent=1 // pred_check
      %p45 = pneg %p44
    $region19: #{tpu_custom_call.1} parent=1 // pred_check_branch
      %47 = sbr.rel (%p45) target = $region21
    $region20: #{tpu_custom_call.1} parent=1 // pred_region
      %48 = vst [vmem:[#allocation7] sm:$0xff] 0.0
    $region21: #{tpu_custom_call.1} parent=1 // pred_fallthru
      _
    %v49 = vld [vmem:[#allocation2] sm:$0xff]
    %v50 = vld [vmem:[#allocation2 + $0x8] sm:$0xf]
    %v51 = vld [vmem:[#allocation5] sm:$0xff]
    %v52 = vld [vmem:[#allocation5 + $0x8] sm:$0xf]
    %v53 = vlog2.pop %v49
    %v54 = vmul.f32 %v53, 0.6931472
    %v55 = vlog2.pop %v50
    %v56 = vmul.f32 %v55, 0.6931472
    %v57 = vmax.f32 %v54, -100.0
    %v58 = vmax.f32 %v56, -100.0
    %v59 = vsub.f32 1.0, %v49
    %v60 = vsub.f32 1.0, %v50
    %v61 = vlog2.pop %v59
    %v62 = vmul.f32 %v61, 0.6931472
    %v63 = vlog2.pop %v60
    %v64 = vmul.f32 %v63, 0.6931472
    %v65 = vmax.f32 %v62, -100.0
    %v66 = vmax.f32 %v64, -100.0
    %v67 = vsub.f32 %v57, %v65
    %v68 = vsub.f32 %v58, %v66
    %v69 = vmul.f32 %v51, %v67
    %v70 = vmul.f32 %v52, %v68
    %v71 = vadd.f32 %v65, %v69
    %v72 = vadd.f32 %v66, %v70
    %p73 = scmp.lt.s32.totalorder 0, 1
    // Predicated region
    $region22: #{tpu_custom_call.1} parent=1 // pred_check
      %p74 = pneg %p73
    $region23: #{tpu_custom_call.1} parent=1 // pred_check_branch
      %76 = sbr.rel (%p74) target = $region25
    $region24: #{tpu_custom_call.1} parent=1 // pred_region
      %v77 = vld [vmem:[#allocation7] sm:$0x1]
      %vm78 = vcmask 1043456
      %v79 = vsel %vm78, %v72, 0.0
      %v80 = vadd.f32 %v71, %v79
      %v81 = vrot.slane %v80, 4
      %v82 = vadd.f32 %v80, %v81
      %v83 = vrot.slane %v82, 2
      %v84 = vadd.f32 %v82, %v83
      %v85 = vrot.slane %v84, 1
      %v86 = vadd.f32 %v84, %v85
      %v87 = vadd.f32 %v77, %v86
      %88 = vst [vmem:[#allocation7] sm:$0x1] %v87
    $region25: #{tpu_custom_call.1} parent=1 // pred_fallthru
      _
    %p89 = scmp.ge.s32.totalorder 0, 1
    // Predicated region
    $region26: #{tpu_custom_call.1} parent=1 // pred_check
      %p90 = pneg %p89
    $region27: #{tpu_custom_call.1} parent=1 // pred_check_branch
      %92 = sbr.rel (%p90) target = $region29
    $region28: #{tpu_custom_call.1} parent=1 // pred_region
      %v93 = vlaneseq
      %v94 = vshrl.u32 %v93, 7
      %v95 = vadd.s32 %v94, 8
      %s96 = smul.u32 0, 12
      %v97 = vstv %s96
      %v98 = vadd.s32 %v94, %v97
      %v99 = vadd.s32 %v95, %v97
      %vm100 = vcmp.lt.s32.totalorder %v98, 12
      %vm101 = vcmp.lt.s32.totalorder %v99, 12
      %v102 = vsel %vm100, %v71, 0.0
      %v103 = vsel %vm101, %v72, 0.0
      %v104 = vld [vmem:[#allocation7] sm:$0x1]
      %vm105 = vcmask 1043456
      %v106 = vsel %vm105, %v103, 0.0
      %v107 = vadd.f32 %v102, %v106
      %v108 = vrot.slane %v107, 4
      %v109 = vadd.f32 %v107, %v108
      %v110 = vrot.slane %v109, 2
      %v111 = vadd.f32 %v109, %v110
      %v112 = vrot.slane %v111, 1
      %v113 = vadd.f32 %v111, %v112
      %v114 = vadd.f32 %v104, %v113
      %115 = vst [vmem:[#allocation7] sm:$0x1] %v114
    $region29: #{tpu_custom_call.1} parent=1 // pred_fallthru
      _
    // Predicated region
    $region30: #{tpu_custom_call.1} parent=1 // pred_check
      _
    $region31: #{tpu_custom_call.1} parent=1 // pred_check_branch
      %117 = sbr.rel (0) target = $region33
    $region32: #{tpu_custom_call.1} parent=1 // pred_region
      %119 = vsyncadd [#allocation4], 0
      %s121 = sshll.u32 [#allocation7], 4
      %s122 = int_to_ptr.vmem [resolvable:$true] %s121
      %s123 = sshll.u32 %s2, 4
      %s124 = int_to_ptr.hbm [resolvable:$true] %s123
      %126 = dma.vmem_to_hbm [thread:$0]  %s122, 128, %s124, [#allocation4]
    $region33: #{tpu_custom_call.1} parent=1 // pred_fallthru
      _
    // Predicated region
    $region34: #{tpu_custom_call.1} parent=1 // pred_check
      _
    $region35: #{tpu_custom_call.1} parent=1 // pred_check_branch
      %128 = sbr.rel (0) target = $region37
    $region36: #{tpu_custom_call.1} parent=1 // pred_region
      %130 = dma.done [#allocation4], 128
    $region37: #{tpu_custom_call.1} parent=1 // pred_fallthru
      _
    %131 = vsyncpa [#allocation3], 1
    %132 = vsyncpa [#allocation6], 1
    %133 = vsyncpa [#allocation4], 1

</llo_original>
